<compile_context>
chip_gen: v5e
topology: v5e:2x2
jax: 0.10.0
libtpu: 0.0.40
codegen_flags: <defaults>
</compile_context>

<pallas_src>
import functools

import jax
import jax.numpy as jnp
from jax import lax
from jax.experimental import pallas as pl
from jax.experimental.pallas import tpu as pltpu

_EPS = 1e-7
_DMA_KNEE_BYTES = 1 * 1024 * 1024      # blocks >= this are already ~85% of HBM roofline
_BLOCK_TARGET_BYTES = 2 * 1024 * 1024  # target block size for streaming kernels


# ---------------------------------------------------------------------------
# Chip / VMEM introspection (generation-aware budgets)
# ---------------------------------------------------------------------------
@functools.lru_cache(maxsize=None)
def _chip_traits():
    kind = ""
    try:
        kind = jax.devices()[0].device_kind.lower()
    except Exception:
        pass
    vmem_bytes = None
    try:
        info = pltpu.get_tpu_info()
        for attr in ("vmem_capacity_bytes", "vmem_bytes", "vmem_size_bytes"):
            try:
                v = int(getattr(info, attr))
            except (AttributeError, TypeError, ValueError):
                continue
            if v > 0:
                vmem_bytes = v
                break
    except Exception:
        vmem_bytes = None
    if vmem_bytes is None:
        if any(t in kind for t in ("v2", "v3")):
            vmem_bytes = 16 * 1024 * 1024
        elif any(t in kind for t in ("v4", "v5", "v6")):
            vmem_bytes = 128 * 1024 * 1024      # v4 / v5e / v5p / v6e: 128 MiB VMEM
        else:
            vmem_bytes = 64 * 1024 * 1024       # v7x (or unknown): 64 MiB per TC
    multi_tc = "v7" in kind                      # 2 TCs share the "parallel" grid axes
    bf16_valu = ("v6" in kind) or ("v7" in kind)
    return kind, vmem_bytes, multi_tc, bf16_valu


@functools.lru_cache(maxsize=None)
def _budgets():
    """(fused_residency_budget, vmem_limit_bytes, multi_tc, bf16_valu)."""
    _, vmem_bytes, multi_tc, bf16_valu = _chip_traits()
    fused_budget = int(vmem_bytes * 0.65)   # v5e/v6e ~83 MiB, v7x ~41 MiB
    vmem_limit = int(vmem_bytes * 0.85)     # v5e/v6e ~108 MiB, v7x ~54 MiB
    return fused_budget, vmem_limit, multi_tc, bf16_valu


def _compute_dtype_for(x_dtype, bf16_valu):
    """bf16 affine math only where the VPU has bf16 (v6e/v7x) and x is bf16."""
    return jnp.bfloat16 if (x_dtype == jnp.bfloat16 and bf16_valu) else jnp.float32


# ---------------------------------------------------------------------------
# Kernels
# ---------------------------------------------------------------------------
def _l2_fused_kernel(x_ref, gamma_ref, beta_ref, out_ref, mean_ref, scale_ref,
                     *, inv_m, eps, compute_dtype):
    """Single pass: the full (N, c_tile, HW) per-channel reduction is resident.
    Moments accumulate in f32 (single-pass E[x^2]-E[x]^2 with clamp); the affine
    store runs in `compute_dtype` (bf16 on v6e/v7x for bf16 inputs, else f32)."""
    x = x_ref[...]                                               # (N, Ct, HW)
    xf = x.astype(jnp.float32)
    # staged reduction: lane (XLU) reduce over HW, then the batch axis
    s = jnp.sum(jnp.sum(xf, axis=2, keepdims=True), axis=0, keepdims=True)
    sq = jnp.sum(jnp.sum(xf * xf, axis=2, keepdims=True), axis=0, keepdims=True)
    mu = s * inv_m                                               # (1, Ct, 1)
    var = jnp.maximum(sq * inv_m - mu * mu, 0.0)                 # guard cancellation
    scale = lax.rsqrt(var + eps)                                 # EUP rsqrt, not pow
    a = gamma_ref[...][None] * scale                             # folded affine:
    b = beta_ref[...][None] - mu * a                             #   out = x*a + b
    out_ref[...] = (x.astype(compute_dtype) * a.astype(compute_dtype)
                    + b.astype(compute_dtype)).astype(out_ref.dtype)
    mean_ref[...] = mu[0]
    scale_ref[...] = scale[0]


def _l2_stats_kernel(x_ref, mean_ref, scale_ref, sum_sc, sq_sc, *, inv_m, eps):
    """Two-phase, phase 1: accumulate per-channel sum / sum-of-squares over the
    batch-tile and HW-chunk ('arbitrary') grid axes; emit mean/scale at the end."""
    ni = pl.program_id(1)
    hi = pl.program_id(2)

    @pl.when(jnp.logical_and(ni == 0, hi == 0))
    def _init():
        sum_sc[...] = jnp.zeros_like(sum_sc)
        sq_sc[...] = jnp.zeros_like(sq_sc)

    xf = x_ref[...].astype(jnp.float32)                          # (nt, Ct, hwc)
    sum_sc[...] += jnp.sum(jnp.sum(xf, axis=2, keepdims=True), axis=0)
    sq_sc[...] += jnp.sum(jnp.sum(xf * xf, axis=2, keepdims=True), axis=0)

    @pl.when(jnp.logical_and(ni == pl.num_programs(1) - 1,
                             hi == pl.num_programs(2) - 1))
    def _finalize():
        mu = sum_sc[...] * inv_m
        # Single-pass E[x^2]-E[x]^2 in f32; the clamp guards against the small
        # negatives cancellation can produce for large-mean activations.
        var = jnp.maximum(sq_sc[...] * inv_m - mu * mu, 0.0)
        mean_ref[...] = mu
        scale_ref[...] = lax.rsqrt(var + eps)


def _affine_flat_kernel(x_ref, a_ref, b_ref, out_ref, *, compute_dtype):
    """Lane-dense out = x * a + b on the flattened (N, C*HW) view; a, b are
    pre-broadcast per-element vectors already in compute_dtype."""
    out_ref[...] = (x_ref[...].astype(compute_dtype) * a_ref[...][None, :]
                    + b_ref[...][None, :]).astype(out_ref.dtype)


# ---------------------------------------------------------------------------
# Tiling heuristics
# ---------------------------------------------------------------------------
def _round_up(v, m):
    return -(-v // m) * m


def _valid_c_tiles(C):
    """Legal channel tiles for the second-to-last (sublane) block dim: multiples
    of 8 dividing C, or the full C (the only option when C % 8 != 0)."""
    tiles = {C}
    tiles.update(t for t in range(8, C, 8) if C % t == 0)
    return sorted(tiles)


def _pick_fused_c_tile(C, N, HW, itemsize, fused_budget, multi_tc):
    """Channel tile for the fused 1R+1W path, or None if the whole
    (N, c_tile, HW) per-channel reduction cannot stay VMEM-resident."""
    hw_pad = max(_round_up(HW, 128), 128)          # lane padding in VMEM layout
    # 2x double-buffered input + 2x double-buffered output blocks (input dtype)
    # plus ~2 f32-block temporaries inside the kernel (single-pass moments).
    per_c_vmem = N * hw_pad * (4 * itemsize + 8)
    per_c_hbm = N * HW * itemsize
    tiles = [t for t in _valid_c_tiles(C) if t * per_c_vmem <= fused_budget]
    if not tiles:
        return None
    # Smallest tile at/above the DMA knee -> as many grid steps as possible, so
    # input-DMA(i+1)/compute(i)/writeback(i-1) stay overlapped.
    at_knee = [t for t in tiles if t * per_c_hbm >= _DMA_KNEE_BYTES]
    tile = min(at_knee) if at_knee else max(tiles)
    if multi_tc and C // tile < 4:
        # v7x only: prefer >= 4 channel tiles so the 2 TensorCores load-balance.
        alts = [t for t in tiles if C // t >= 4]
        if alts:
            tile = max(alts)
    return tile


def _pick_stream_tiles(N, C, HW, itemsize):
    """(n_tile, c_tile, hw_chunk) for the streaming stats kernel, grown towards
    the ~2 MiB DMA sweet spot (HW chunked in multiples of 128 when possible)."""
    c_tiles = _valid_c_tiles(C)
    hw_chunks = sorted({HW} | {h for h in range(128, HW, 128) if HW % h == 0})
    # TODO(synk): if HW is huge and not a multiple of 128 the only legal chunk is
    # the full HW; a manual pl.ds-based inner loop would be needed to split it.

    def hbm_bytes(nt, ct, hwc):
        return nt * ct * hwc * itemsize

    hwc = hw_chunks[0]
    for h in hw_chunks:
        if hbm_bytes(1, c_tiles[0], h) <= _BLOCK_TARGET_BYTES:
            hwc = h
    ct = c_tiles[0]
    for c in c_tiles:
        if hbm_bytes(1, c, hwc) <= _BLOCK_TARGET_BYTES:
            ct = c
    nt = 1
    for d in range(1, N + 1):
        if N % d == 0 and hbm_bytes(d, ct, hwc) <= _BLOCK_TARGET_BYTES:
            nt = d
    return nt, ct, hwc


def _pick_flat_tiles(N, L, itemsize):
    """(n_tile, l_chunk) for the lane-dense flattened affine pass."""
    l_chunks = sorted({L} | {l for l in range(128, L, 128) if L % l == 0})
    lc = l_chunks[0]
    for l in l_chunks:
        if l * itemsize <= _BLOCK_TARGET_BYTES:
            lc = l
    # second-to-last block dim must be a multiple of 8 or the full N
    n_tiles = sorted({N} | {d for d in range(8, N, 8) if N % d == 0})
    nt = n_tiles[0]
    for d in n_tiles:
        if d * lc * itemsize <= _BLOCK_TARGET_BYTES:
            nt = d
    return nt, lc


# ---------------------------------------------------------------------------
# Wrappers
# ---------------------------------------------------------------------------
def _apply_affine_flat(x_ncm, a_c1, b_c1, *, vmem_limit, compute_dtype):
    """out = x * a + b with per-channel a, b, computed on the lane-dense
    flattened (N, C*HW) view (full-lane stores even when HW % 128 != 0)."""
    N, C, HW = x_ncm.shape
    L = C * HW
    x2 = x_ncm.reshape(N, L)                                    # free reshape
    a_full = jnp.broadcast_to(a_c1.astype(compute_dtype), (C, HW)).reshape(L)
    b_full = jnp.broadcast_to(b_c1.astype(compute_dtype), (C, HW)).reshape(L)
    nt, lc = _pick_flat_tiles(N, L, jnp.dtype(x_ncm.dtype).itemsize)
    out = pl.pallas_call(
        functools.partial(_affine_flat_kernel, compute_dtype=compute_dtype),
        out_shape=jax.ShapeDtypeStruct((N, L), x_ncm.dtype),
        grid=(N // nt, L // lc),
        in_specs=[
            pl.BlockSpec((nt, lc), lambda ni, li: (ni, li)),
            pl.BlockSpec((lc,), lambda ni, li: (li,)),
            pl.BlockSpec((lc,), lambda ni, li: (li,)),
        ],
        out_specs=pl.BlockSpec((nt, lc), lambda ni, li: (ni, li)),
        compiler_params=pltpu.CompilerParams(
            dimension_semantics=("parallel", "parallel"),
            vmem_limit_bytes=vmem_limit),
    )(x2, a_full, b_full)
    return out.reshape(N, C, HW)


def l2_forward(x_nchw, gamma_c, beta_c, *, force_two_phase=False):
    """Training-mode forward of L2 (noise=False path) on an NCHW input.

    Returns (out_nchw, batch_mean (C,), batch_scale (C,)); the latter two are the
    quantities the PyTorch module folds into running_mean / running_var.
    """
    # TODO(synk): the noise=True training branch (multiplicative Gaussian noise
    # scaled by 0.1*std) is not implemented; the module default is noise=False.
    N, C, H, W = x_nchw.shape
    HW = H * W
    M = N * HW
    itemsize = jnp.dtype(x_nchw.dtype).itemsize

    fused_budget, vmem_limit, multi_tc, bf16_valu = _budgets()
    compute_dtype = _compute_dtype_for(x_nchw.dtype, bf16_valu)

    x = x_nchw.reshape(N, C, HW)                   # free reshape, no transpose
    gamma = gamma_c.reshape(C, 1).astype(jnp.float32)
    beta = beta_c.reshape(C, 1).astype(jnp.float32)

    c_tile = None if force_two_phase else _pick_fused_c_tile(
        C, N, HW, itemsize, fused_budget, multi_tc)

    if c_tile is not None:
        # ---- single-pass fused path: 1 read + 1 write of x through HBM ----
        out_ncm, mean, scale = pl.pallas_call(
            functools.partial(_l2_fused_kernel, inv_m=1.0 / M, eps=_EPS,
                              compute_dtype=compute_dtype),
            out_shape=(
                jax.ShapeDtypeStruct((N, C, HW), x.dtype),
                jax.ShapeDtypeStruct((C, 1), jnp.float32),
                jax.ShapeDtypeStruct((C, 1), jnp.float32),
            ),
            grid=(C // c_tile,),
            in_specs=[
                pl.BlockSpec((N, c_tile, HW), lambda ci: (0, ci, 0)),
                pl.BlockSpec((c_tile, 1), lambda ci: (ci, 0)),
                pl.BlockSpec((c_tile, 1), lambda ci: (ci, 0)),
            ],
            out_specs=(
                pl.BlockSpec((N, c_tile, HW), lambda ci: (0, ci, 0)),
                pl.BlockSpec((c_tile, 1), lambda ci: (ci, 0)),
                pl.BlockSpec((c_tile, 1), lambda ci: (ci, 0)),
            ),
            compiler_params=pltpu.CompilerParams(
                dimension_semantics=("parallel",),
                vmem_limit_bytes=vmem_limit),
        )(x, gamma, beta)
    else:
        # ---- two-phase path (2 reads + 1 write): stats over (n_tile, c_tile,
        #      hw_chunk) blocks + lane-dense flattened affine pass ----
        nt, ct2, hwc = _pick_stream_tiles(N, C, HW, itemsize)
        mean, scale = pl.pallas_call(
            functools.partial(_l2_stats_kernel, inv_m=1.0 / M, eps=_EPS),
            out_shape=(
                jax.ShapeDtypeStruct((C, 1), jnp.float32),
                jax.ShapeDtypeStruct((C, 1), jnp.float32),
            ),
            grid=(C // ct2, N // nt, HW // hwc),
            in_specs=[pl.BlockSpec((nt, ct2, hwc),
                                   lambda ci, ni, hi: (ni, ci, hi))],
            out_specs=(
                pl.BlockSpec((ct2, 1), lambda ci, ni, hi: (ci, 0)),
                pl.BlockSpec((ct2, 1), lambda ci, ni, hi: (ci, 0)),
            ),
            scratch_shapes=[pltpu.VMEM((ct2, 1), jnp.float32),
                            pltpu.VMEM((ct2, 1), jnp.float32)],
            compiler_params=pltpu.CompilerParams(
                dimension_semantics=("parallel", "arbitrary", "arbitrary"),
                vmem_limit_bytes=vmem_limit),
        )(x)
        a = gamma * scale                  # folded affine coefficients, (C, 1)
        b = beta - mean * a
        out_ncm = _apply_affine_flat(x, a, b, vmem_limit=vmem_limit,
                                     compute_dtype=compute_dtype)

    return out_ncm.reshape(N, C, H, W), mean.reshape(C), scale.reshape(C)


def l2_forward_eval(x_nchw, gamma_c, beta_c, running_mean_c, running_var_c):
    """Eval-mode forward: uses stored running stats (the module stores *scale*
    in running_var). Pure affine, one lane-dense pipelined pass."""
    N, C, H, W = x_nchw.shape
    HW = H * W
    _, vmem_limit, _, bf16_valu = _budgets()
    compute_dtype = _compute_dtype_for(x_nchw.dtype, bf16_valu)
    x = x_nchw.reshape(N, C, HW)
    gamma = gamma_c.reshape(C, 1).astype(jnp.float32)
    beta = beta_c.reshape(C, 1).astype(jnp.float32)
    mean = running_mean_c.reshape(C, 1).astype(jnp.float32)
    scale = running_var_c.reshape(C, 1).astype(jnp.float32)
    a = gamma * scale
    b = beta - mean * a
    out = _apply_affine_flat(x, a, b, vmem_limit=vmem_limit,
                             compute_dtype=compute_dtype)
    return out.reshape(N, C, H, W)


def update_running_stats(running_mean, running_var, batch_mean, batch_scale,
                         momentum=0.1):
    """running.mul_(momentum).add_(new * (1 - momentum)) — matches the module
    (intentionally the module's own, non-standard-BN momentum convention)."""
    new_mean = running_mean * momentum + batch_mean * (1.0 - momentum)
    new_var = running_var * momentum + batch_scale * (1.0 - momentum)
    return new_mean, new_var


# ---------------------------------------------------------------------------
# Demo / correctness check
# ---------------------------------------------------------------------------
if __name__ == "__main__":
    key = jax.random.PRNGKey(0)
    kx, kg, kb = jax.random.split(key, 3)

    N, C, H, W = 2, 4, 16, 16
    x = jax.random.normal(kx, (N, C, H, W), dtype=jnp.float32) * 2.0 + 0.5

    # Deterministic synthetic parameter init (torch Parameter(Tensor(C)) is
    # uninitialized in the original module).
    gamma = 1.0 + 0.1 * jax.random.normal(kg, (C,), dtype=jnp.float32)  # self.scale
    beta = 0.1 * jax.random.normal(kb, (C,), dtype=jnp.float32)         # self.mean

    # Pure-JAX reference mirroring the PyTorch L2.forward (training, noise=False).
    mean_ref = jnp.mean(x.reshape(N, C, -1), axis=-1).mean(0)                   # (C,)
    t = jnp.transpose(x, (1, 0, 2, 3)).reshape(C, -1).T                         # (M, C)
    var_ref = jnp.mean(jnp.abs(t - mean_ref) ** 2, axis=0)                      # (C,)
    scale_ref = (var_ref + 1e-7) ** (-0.5)
    ref = (x - mean_ref[None, :, None, None]) * scale_ref[None, :, None, None]
    ref = ref * gamma[None, :, None, None] + beta[None, :, None, None]

    # Fused single-pass path.
    out, bm, bs = l2_forward(x, gamma, beta)
    jax.block_until_ready(out)
    assert out.shape == x.shape and out.dtype == x.dtype
    assert jnp.allclose(out, ref, atol=1e-4, rtol=1e-4), "fused output mismatch"
    assert jnp.allclose(bm, mean_ref, atol=1e-5, rtol=1e-5), "batch mean mismatch"
    assert jnp.allclose(bs, scale_ref, atol=1e-4, rtol=1e-4), "batch scale mismatch"

    # Two-phase (large-activation) path, forced so that code path is exercised.
    out2, bm2, bs2 = l2_forward(x, gamma, beta, force_two_phase=True)
    jax.block_until_ready(out2)
    assert jnp.allclose(out2, ref, atol=1e-4, rtol=1e-4), "two-phase output mismatch"
    assert jnp.allclose(bm2, mean_ref, atol=1e-5, rtol=1e-5), "two-phase mean mismatch"
    assert jnp.allclose(bs2, scale_ref, atol=1e-4, rtol=1e-4), "two-phase scale mismatch"

    # Running-stat update (the PyTorch buffer side effect) + eval-mode path.
    rm0 = jnp.zeros((C,), jnp.float32)
    rv0 = jnp.zeros((C,), jnp.float32)
    rm1, rv1 = update_running_stats(rm0, rv0, bm, bs, momentum=0.1)
    out_eval = l2_forward_eval(x, gamma, beta, bm, bs)   # running stats == batch stats
    jax.block_until_ready((rm1, rv1, out_eval))
    assert jnp.allclose(out_eval, ref, atol=1e-4, rtol=1e-4), "eval output mismatch"

    print("KERNEL_OK")
</pallas_src>

<mosaic_0001>
module attributes {stable_mosaic.version = 11 : i64} {
  func.func @_l2_fused_kernel(%arg0: i32, %arg1: memref<2x4x256xf32, #tpu.memory_space<vmem>>, %arg2: memref<4x1xf32, #tpu.memory_space<vmem>>, %arg3: memref<4x1xf32, #tpu.memory_space<vmem>>, %arg4: memref<2x4x256xf32, #tpu.memory_space<vmem>>, %arg5: memref<4x1xf32, #tpu.memory_space<vmem>>, %arg6: memref<4x1xf32, #tpu.memory_space<vmem>>) attributes {dimension_semantics = [#tpu.dimension_semantics<parallel>], iteration_bounds = array<i64: 1>, scalar_prefetch = 0 : i64, scratch_operands = 0 : i64, tpu.core_type = #tpu.core_type<tc>, window_params = [{transform_indices = @transform_0, window_bounds = array<i64: 2, 4, 256>}, {transform_indices = @transform_1, window_bounds = array<i64: 4, 1>}, {transform_indices = @transform_2, window_bounds = array<i64: 4, 1>}, {transform_indices = @transform_3, window_bounds = array<i64: 2, 4, 256>}, {transform_indices = @transform_4, window_bounds = array<i64: 4, 1>}, {transform_indices = @transform_5, window_bounds = array<i64: 4, 1>}]} {
    %c0 = arith.constant 0 : index
    %c0_0 = arith.constant 0 : index
    %c0_1 = arith.constant 0 : index
    %0 = vector.load %arg1[%c0, %c0_0, %c0_1] : memref<2x4x256xf32, #tpu.memory_space<vmem>>, vector<2x4x256xf32>
    %cst = arith.constant dense<0.000000e+00> : vector<2x4xf32>
    %1 = vector.multi_reduction <add>, %0, %cst [2] : vector<2x4x256xf32> to vector<2x4xf32>
    %2 = vector.shape_cast %1 : vector<2x4xf32> to vector<2x4x1xf32>
    %cst_2 = arith.constant dense<0.000000e+00> : vector<4x1xf32>
    %3 = vector.multi_reduction <add>, %2, %cst_2 [0] : vector<2x4x1xf32> to vector<4x1xf32>
    %4 = vector.shape_cast %3 : vector<4x1xf32> to vector<1x4x1xf32>
    %5 = arith.mulf %0, %0 : vector<2x4x256xf32>
    %cst_3 = arith.constant dense<0.000000e+00> : vector<2x4xf32>
    %6 = vector.multi_reduction <add>, %5, %cst_3 [2] : vector<2x4x256xf32> to vector<2x4xf32>
    %7 = vector.shape_cast %6 : vector<2x4xf32> to vector<2x4x1xf32>
    %cst_4 = arith.constant dense<0.000000e+00> : vector<4x1xf32>
    %8 = vector.multi_reduction <add>, %7, %cst_4 [0] : vector<2x4x1xf32> to vector<4x1xf32>
    %9 = vector.shape_cast %8 : vector<4x1xf32> to vector<1x4x1xf32>
    %cst_5 = arith.constant 0.001953125 : f32
    %10 = vector.broadcast %cst_5 : f32 to vector<1x4x1xf32>
    %11 = arith.mulf %4, %10 : vector<1x4x1xf32>
    %cst_6 = arith.constant 0.001953125 : f32
    %12 = vector.broadcast %cst_6 : f32 to vector<1x4x1xf32>
    %13 = arith.mulf %9, %12 : vector<1x4x1xf32>
    %14 = arith.mulf %11, %11 : vector<1x4x1xf32>
    %15 = arith.subf %13, %14 : vector<1x4x1xf32>
    %cst_7 = arith.constant 0.000000e+00 : f32
    %16 = vector.broadcast %cst_7 : f32 to vector<1x4x1xf32>
    %17 = arith.maximumf %15, %16 : vector<1x4x1xf32>
    %cst_8 = arith.constant 1.000000e-07 : f32
    %18 = vector.broadcast %cst_8 : f32 to vector<1x4x1xf32>
    %19 = arith.addf %17, %18 : vector<1x4x1xf32>
    %20 = math.rsqrt %19 : vector<1x4x1xf32>
    %c0_9 = arith.constant 0 : index
    %c0_10 = arith.constant 0 : index
    %21 = vector.load %arg2[%c0_9, %c0_10] : memref<4x1xf32, #tpu.memory_space<vmem>>, vector<4x1xf32>
    %22 = vector.shape_cast %21 : vector<4x1xf32> to vector<1x4x1xf32>
    %23 = arith.mulf %22, %20 : vector<1x4x1xf32>
    %c0_11 = arith.constant 0 : index
    %c0_12 = arith.constant 0 : index
    %24 = vector.load %arg3[%c0_11, %c0_12] : memref<4x1xf32, #tpu.memory_space<vmem>>, vector<4x1xf32>
    %25 = vector.shape_cast %24 : vector<4x1xf32> to vector<1x4x1xf32>
    %26 = arith.mulf %11, %23 : vector<1x4x1xf32>
    %27 = arith.subf %25, %26 : vector<1x4x1xf32>
    %28 = vector.broadcast %23 : vector<1x4x1xf32> to vector<2x4x256xf32>
    %29 = arith.mulf %0, %28 : vector<2x4x256xf32>
    %30 = vector.broadcast %27 : vector<1x4x1xf32> to vector<2x4x256xf32>
    %31 = arith.addf %29, %30 : vector<2x4x256xf32>
    %c0_13 = arith.constant 0 : index
    %c0_14 = arith.constant 0 : index
    %c0_15 = arith.constant 0 : index
    %32 = vector.load %arg4[%c0_13, %c0_14, %c0_15] : memref<2x4x256xf32, #tpu.memory_space<vmem>>, vector<2x4x256xf32>
    tpu.vector_store %arg4[%c0_13, %c0_14, %c0_15], %31 {strides = array<i32>} : memref<2x4x256xf32, #tpu.memory_space<vmem>>, vector<2x4x256xf32>,
    %33 = vector.shape_cast %11 : vector<1x4x1xf32> to vector<4x1xf32>
    %c0_16 = arith.constant 0 : index
    %c0_17 = arith.constant 0 : index
    %34 = vector.load %arg5[%c0_16, %c0_17] : memref<4x1xf32, #tpu.memory_space<vmem>>, vector<4x1xf32>
    tpu.vector_store %arg5[%c0_16, %c0_17], %33 {strides = array<i32>} : memref<4x1xf32, #tpu.memory_space<vmem>>, vector<4x1xf32>,
    %35 = vector.shape_cast %20 : vector<1x4x1xf32> to vector<4x1xf32>
    %c0_18 = arith.constant 0 : index
    %c0_19 = arith.constant 0 : index
    %36 = vector.load %arg6[%c0_18, %c0_19] : memref<4x1xf32, #tpu.memory_space<vmem>>, vector<4x1xf32>
    tpu.vector_store %arg6[%c0_18, %c0_19], %35 {strides = array<i32>} : memref<4x1xf32, #tpu.memory_space<vmem>>, vector<4x1xf32>,
    return
  }
  func.func @transform_0(%arg0: i32) -> (i32, i32, i32) {
    %c0_i32 = arith.constant 0 : i32
    %c0_i32_0 = arith.constant 0 : i32
    %c0_i32_1 = arith.constant 0 : i32
    return %c0_i32, %arg0, %c0_i32_0 : i32, i32, i32
  }
  func.func @transform_1(%arg0: i32) -> (i32, i32) {
    %c0_i32 = arith.constant 0 : i32
    %c0_i32_0 = arith.constant 0 : i32
    return %arg0, %c0_i32 : i32, i32
  }
  func.func @transform_2(%arg0: i32) -> (i32, i32) {
    %c0_i32 = arith.constant 0 : i32
    %c0_i32_0 = arith.constant 0 : i32
    return %arg0, %c0_i32 : i32, i32
  }
  func.func @transform_3(%arg0: i32) -> (i32, i32, i32) {
    %c0_i32 = arith.constant 0 : i32
    %c0_i32_0 = arith.constant 0 : i32
    %c0_i32_1 = arith.constant 0 : i32
    return %c0_i32, %arg0, %c0_i32_0 : i32, i32, i32
  }
  func.func @transform_4(%arg0: i32) -> (i32, i32) {
    %c0_i32 = arith.constant 0 : i32
    %c0_i32_0 = arith.constant 0 : i32
    return %arg0, %c0_i32 : i32, i32
  }
  func.func @transform_5(%arg0: i32) -> (i32, i32) {
    %c0_i32 = arith.constant 0 : i32
    %c0_i32_0 = arith.constant 0 : i32
    return %arg0, %c0_i32 : i32, i32
  }
}

</mosaic_0001>

<llo_original>
// kernel: tpu_custom_call.1
$region0: #{tpu_custom_call.1}
  #allocation0 [shape = 'u32[]', space=smem, size = 0x4, offset = 0x4, fixed_abs, tag = 'smem constant byte address 0x4 - core index']
  #allocation1 [shape = 'u32[72,128]{1,0:T(1,128)}', space=vmem, size = 0x9000, scoped, tag = 'internal scratch']
  %s0 = inlined_call_operand.hbm [shape: f32[2,4,256], index: 0, kind: input, shape index: {}]
  %s1 = inlined_call_operand.vmem [shape: f32[4,1], index: 1, kind: input, shape index: {}]
  %s2 = inlined_call_operand.vmem [shape: f32[4,1], index: 2, kind: input, shape index: {}]
  %s3 = inlined_call_operand.hbm [shape: f32[2,4,256], index: 3, kind: output, shape index: {0}]
  %s4 = inlined_call_operand.vmem [shape: f32[4,1], index: 4, kind: output, shape index: {1}]
  %s5 = inlined_call_operand.vmem [shape: f32[4,1], index: 5, kind: output, shape index: {2}]
  %6 = xla_tuple %s3, %s4, %s5
  %s7 = sld [smem:[#allocation0]]
  $region42: #{tpu_custom_call.1} parent=0
    _
  %s9 = ssub.s32 1, %s7
  %s10 = scalar_select 0, %s9, %s7
  $region1: #{tpu_custom_call.1} parent=0
    #allocation2 [shape = 'u8[8192]{0}', space=vmem, size = 0x2000, scoped, tag = 'input window, operand 0, single buffered']
    #allocation3 [shape = 's32[1]{0}', space=sflag, size = 0x4, scoped, tag = 'scoped memory for tpu_custom_call.1']
    #allocation4 [shape = 's32[1]{0}', space=sflag, size = 0x4, scoped, tag = 'scoped memory for tpu_custom_call.1']
    #allocation5 [shape = 'u8[8192]{0}', space=vmem, size = 0x2000, scoped, tag = 'output window, operand 0, single buffered']
    %11 = vsyncpa [#allocation3], 0
    %12 = vsyncpa [#allocation4], 0
    // Predicated region
    $region2: #{tpu_custom_call.1} parent=1 // pred_check
      _
    $region3: #{tpu_custom_call.1} parent=1 // pred_check_branch
      %14 = sbr.rel (0) target = $region5
    $region4: #{tpu_custom_call.1} parent=1 // pred_region
      %16 = vsyncadd [#allocation3], 0
      %s17 = sshll.u32 %s0, 4
      %s18 = int_to_ptr.hbm [resolvable:$true] %s17
      %s19 = sshll.u32 [#allocation2], 4
      %s20 = int_to_ptr.vmem [resolvable:$true] %s19
      %25 = dma.hbm_to_vmem [thread:$0]  %s18, 256, %s20, [#allocation3], 128, 128, 8
    $region5: #{tpu_custom_call.1} parent=1 // pred_fallthru
      _
    // Predicated region
    $region6: #{tpu_custom_call.1} parent=1 // pred_check
      _
    $region7: #{tpu_custom_call.1} parent=1 // pred_check_branch
      %27 = sbr.rel (0) target = $region9
    $region8: #{tpu_custom_call.1} parent=1 // pred_region
      _
    $region9: #{tpu_custom_call.1} parent=1 // pred_fallthru
      _
    // Predicated region
    $region10: #{tpu_custom_call.1} parent=1 // pred_check
      _
    $region11: #{tpu_custom_call.1} parent=1 // pred_check_branch
      %29 = sbr.rel (0) target = $region13
    $region12: #{tpu_custom_call.1} parent=1 // pred_region
      _
    $region13: #{tpu_custom_call.1} parent=1 // pred_fallthru
      _
    // Predicated region
    $region14: #{tpu_custom_call.1} parent=1 // pred_check
      _
    $region15: #{tpu_custom_call.1} parent=1 // pred_check_branch
      %31 = sbr.rel (0) target = $region17
    $region16: #{tpu_custom_call.1} parent=1 // pred_region
      %33 = dma.done [#allocation3], 256
    $region17: #{tpu_custom_call.1} parent=1 // pred_fallthru
      _
    %v34 = vld [vmem:[#allocation2] sm:$0xff]
    %v35 = vld [vmem:[#allocation2 + $0x8] sm:$0xff]
    %38 = vst [vmem:[#allocation1] ss:$2 sm:$0xff] %v34
    %v39 = vld.sshfl [vmem:[#allocation1] sm:$0xff pattern:$0x75316420]
    %v40 = vld.sshfl [vmem:[#allocation1 + $0x8] sm:$0xff pattern:$0x75316420]
    %s41 = scalar_lea.vmem [#allocation1], 16
    %42 = vst [vmem:[%s41] ss:$2 sm:$0xff] %v35
    %v43 = vld.sshfl [vmem:[#allocation1 + $0x10] sm:$0xff pattern:$0x75316420]
    %v44 = vld.sshfl [vmem:[#allocation1 + $0x18] sm:$0xff pattern:$0x75316420]
    %vm49 = vcmask 1043456
    %v50 = vsel %vm49, %v39, 0.0
    %v51 = vsel %vm49, %v40, 0.0
    %v52 = vadd.f32 %v50, %v51
    %53 = vadd.xlane.f32.xlu0 %v52
    %v54 = vpop.xlane.xlu0 %53
    %v55 = vsel %vm49, %v43, 0.0
    %v56 = vsel %vm49, %v44, 0.0
    %v57 = vadd.f32 %v55, %v56
    %58 = vadd.xlane.f32.xlu0 %v57
    %v59 = vpop.xlane.xlu0 %58
    %v60 = vsel %vm49, %v54, 0.0
    %v61 = vsel %vm49, %v59, 0.0
    %v62 = vadd.f32 %v60, %v61
    %v63 = vmul.f32 %v34, %v34
    %v64 = vmul.f32 %v35, %v35
    %67 = vst [vmem:[#allocation1] ss:$2 sm:$0xff] %v63
    %v68 = vld.sshfl [vmem:[#allocation1] sm:$0xff pattern:$0x75316420]
    %v69 = vld.sshfl [vmem:[#allocation1 + $0x8] sm:$0xff pattern:$0x75316420]
    %s70 = scalar_lea.vmem [#allocation1], 16
    %71 = vst [vmem:[%s70] ss:$2 sm:$0xff] %v64
    %v72 = vld.sshfl [vmem:[#allocation1 + $0x10] sm:$0xff pattern:$0x75316420]
    %v73 = vld.sshfl [vmem:[#allocation1 + $0x18] sm:$0xff pattern:$0x75316420]
    %v78 = vsel %vm49, %v68, 0.0
    %v79 = vsel %vm49, %v69, 0.0
    %v80 = vadd.f32 %v78, %v79
    %81 = vadd.xlane.f32.xlu0 %v80
    %v82 = vpop.xlane.xlu0 %81
    %v83 = vsel %vm49, %v72, 0.0
    %v84 = vsel %vm49, %v73, 0.0
    %v85 = vadd.f32 %v83, %v84
    %86 = vadd.xlane.f32.xlu0 %v85
    %v87 = vpop.xlane.xlu0 %86
    %v88 = vsel %vm49, %v82, 0.0
    %v89 = vsel %vm49, %v87, 0.0
    %v90 = vadd.f32 %v88, %v89
    %v91 = vmul.f32 %v62, 0.001953125
    %v92 = vmul.f32 %v90, 0.001953125
    %v93 = vmul.f32 %v91, %v91
    %v94 = vsub.f32 %v92, %v93
    %v95 = vmax.f32 %v94, 0.0
    %v96 = vadd.f32 %v95, 1e-07
    %v97 = vrsqrt.pop %v96
    %v98 = vmul.f32 %v97, %v96
    %v99 = vmul.f32 %v98, %v97
    %v100 = vmul.f32 0.5, %v99
    %v101 = vsub.f32 1.5, %v100
    %v102 = vmul.f32 %v97, %v101
    %vm103 = vweird.f32 %v96
    %vm104 = vweird.f32 %v97
    %vm105 = vmor %vm103, %vm104
    %v106 = vsel %vm105, %v97, %v102
    %v107 = vld [vmem:[%s1] sm:$0xf]
    %v108 = vmul.f32 %v107, %v106
    %v109 = vld [vmem:[%s2] sm:$0xf]
    %v110 = vmul.f32 %v91, %v108
    %v111 = vsub.f32 %v109, %v110
    %113 = vset.pattern.permute.xlu0 0
    %114 = vperm.xlu0 %113, %v108
    %v115 = vpop.permute.xlu0 %114
    %v117 = vunpack.c.l.s4 839922192
    %v118 = vunpack.c.0.s8 %v117
    %v119 = vperm.slane %v115, %v118
    %v121 = vmul.f32 %v34, %v119
    %v122 = vmul.f32 %v35, %v119
    %124 = vset.pattern.permute.xlu0 0
    %125 = vperm.xlu0 %124, %v111
    %v126 = vpop.permute.xlu0 %125
    %v128 = vunpack.c.l.s4 839922192
    %v129 = vunpack.c.0.s8 %v128
    %v130 = vperm.slane %v126, %v129
    %v132 = vadd.f32 %v121, %v130
    %v133 = vadd.f32 %v122, %v130
    %134 = vst [vmem:[#allocation5] sm:$0xff] %v132
    %135 = vst [vmem:[#allocation5 + $0x8] sm:$0xff] %v133
    %vm136 = vcmask 3072
    %137 = vst.msk [vmem:[%s4] sm:$0xf] %vm136, %v91
    %138 = vst.msk [vmem:[%s5] sm:$0xf] %vm136, %v106
    // Predicated region
    $region18: #{tpu_custom_call.1} parent=1 // pred_check
      _
    $region19: #{tpu_custom_call.1} parent=1 // pred_check_branch
      %140 = sbr.rel (0) target = $region21
    $region20: #{tpu_custom_call.1} parent=1 // pred_region
      %142 = vsyncadd [#allocation4], 0
      %s143 = sshll.u32 [#allocation5], 4
      %s144 = int_to_ptr.vmem [resolvable:$true] %s143
      %s145 = sshll.u32 %s3, 4
      %s146 = int_to_ptr.hbm [resolvable:$true] %s145
      %151 = dma.vmem_to_hbm [thread:$0]  %s144, 256, %s146, [#allocation4], 128, 128, 8
    $region21: #{tpu_custom_call.1} parent=1 // pred_fallthru
      _
    // Predicated region
    $region22: #{tpu_custom_call.1} parent=1 // pred_check
      _
    $region23: #{tpu_custom_call.1} parent=1 // pred_check_branch
      %153 = sbr.rel (0) target = $region25
    $region24: #{tpu_custom_call.1} parent=1 // pred_region
      _
    $region25: #{tpu_custom_call.1} parent=1 // pred_fallthru
      _
    // Predicated region
    $region26: #{tpu_custom_call.1} parent=1 // pred_check
      _
    $region27: #{tpu_custom_call.1} parent=1 // pred_check_branch
      %155 = sbr.rel (0) target = $region29
    $region28: #{tpu_custom_call.1} parent=1 // pred_region
      _
    $region29: #{tpu_custom_call.1} parent=1 // pred_fallthru
      _
    // Predicated region
    $region30: #{tpu_custom_call.1} parent=1 // pred_check
      _
    $region31: #{tpu_custom_call.1} parent=1 // pred_check_branch
      %157 = sbr.rel (0) target = $region33
    $region32: #{tpu_custom_call.1} parent=1 // pred_region
      %159 = dma.done [#allocation4], 256
    $region33: #{tpu_custom_call.1} parent=1 // pred_fallthru
      _
    // Predicated region
    $region34: #{tpu_custom_call.1} parent=1 // pred_check
      _
    $region35: #{tpu_custom_call.1} parent=1 // pred_check_branch
      %161 = sbr.rel (0) target = $region37
    $region36: #{tpu_custom_call.1} parent=1 // pred_region
      _
    $region37: #{tpu_custom_call.1} parent=1 // pred_fallthru
      _
    // Predicated region
    $region38: #{tpu_custom_call.1} parent=1 // pred_check
      _
    $region39: #{tpu_custom_call.1} parent=1 // pred_check_branch
      %163 = sbr.rel (0) target = $region41
    $region40: #{tpu_custom_call.1} parent=1 // pred_region
      _
    $region41: #{tpu_custom_call.1} parent=1 // pred_fallthru
      _
    %164 = vsyncpa [#allocation3], 1
    %165 = vsyncpa [#allocation4], 1

</llo_original>
